<compile_context>
chip_gen: v7x
topology: tpu7x:2x2x1
jax: 0.10.0
libtpu: 0.0.40
codegen_flags: <defaults>
</compile_context>

<pallas_src>
import functools

import jax
import jax.numpy as jnp
from jax.experimental import pallas as pl
from jax.experimental.pallas import tpu as pltpu


def _round_up(x, m):
    return (x + m - 1) // m * m


def _const_spec(block_shape):
    """Constant-index BlockSpec: single-buffered (double-buffering a constant tile
    only doubles resident VMEM with zero overlap benefit)."""
    idx = lambda *_: (0,) * len(block_shape)
    try:
        return pl.BlockSpec(block_shape, idx, pipeline_mode=pl.Buffered(1))
    except TypeError:  # older BlockSpec without pipeline_mode kwarg
        return pl.BlockSpec(block_shape, idx)


def _vmem_limit_bytes():
    """Per-generation VMEM budget with headroom for compiler scratch."""
    phys = None
    try:
        info = pltpu.get_tpu_info()
        phys = getattr(info, "vmem_capacity_bytes", None)
    except Exception:
        phys = None
    if not phys:
        # Unknown chip: conservative value that fits v7x (64 MiB physical) too.
        return 48 * 1024 * 1024
    phys = int(phys)
    # v7x: 64 MiB -> 48 MiB budget; v5e/v6e: 128 MiB -> 100 MiB budget.
    return max(32 * 1024 * 1024, min(phys - 16 * 1024 * 1024, 100 * 1024 * 1024))


def _pooler_end_logits_kernel(x1_ref, x2_ref, w0_ref, aux_ref, w1_ref, b1_ref,
                              out_ref, *, h1):
    # x1_ref: (TM, H1)  x2_ref: (TM, H2)   w0_ref: (H, H)
    # aux_ref: (3, H) = [bias_0; ln_gamma; ln_beta]
    # w1_ref: (H, Cpad)  b1_ref: (1, Cpad)  out_ref: (TM, Cpad)
    mxu_dt = w0_ref.dtype

    # dense_0 with the concat fused: [x1 | x2] @ w0 == x1 @ w0[:h1] + x2 @ w0[h1:]
    # (static row views of the resident weight; operands fed at weight dtype,
    #  accumulation in f32 on the MXU).
    h = jnp.dot(x1_ref[...].astype(mxu_dt), w0_ref[:h1, :],
                preferred_element_type=jnp.float32)
    h = h + jnp.dot(x2_ref[...].astype(mxu_dt), w0_ref[h1:, :],
                    preferred_element_type=jnp.float32)
    h = h + aux_ref[0:1, :].astype(jnp.float32)          # dense_0 bias

    # tanh (EUP), f32.
    h = jnp.tanh(h)

    # LayerNorm over the last dim (eps=1e-5). One sum per reduction, scaled by a
    # static 1/H; rsqrt on the EUP.
    inv_h = 1.0 / h.shape[-1]
    mean = jnp.sum(h, axis=-1, keepdims=True) * inv_h
    centered = h - mean
    var = jnp.sum(centered * centered, axis=-1, keepdims=True) * inv_h
    h = centered * jax.lax.rsqrt(var + 1e-5)
    h = h * aux_ref[1:2, :].astype(jnp.float32) + aux_ref[2:3, :].astype(jnp.float32)

    # dense_1 into the lane-padded (Cpad multiple of 128 -> unmasked lane stores) tile.
    out = jnp.dot(h.astype(w1_ref.dtype), w1_ref[...],
                  preferred_element_type=jnp.float32)
    out = out + b1_ref[...].astype(jnp.float32)
    out_ref[...] = out.astype(out_ref.dtype)


def prepare_params(params, mxu_dtype=None):
    """One-time parameter preparation. Run OUTSIDE the per-call hot path.

    Packs (b0, ln_gamma, ln_beta) into a single (3, H) array, lane-pads the class
    dimension of dense_1 to a multiple of 128, and optionally casts the matmul
    weights to `mxu_dtype` (e.g. jnp.bfloat16) for higher MXU throughput.
    """
    w0, b0, g, beta, w1, b1 = (params["w0"], params["b0"], params["ln_g"],
                               params["ln_b"], params["w1"], params["b1"])
    H, C = w1.shape
    c_pad = _round_up(max(C, 1), 128)
    if mxu_dtype is not None:
        w0 = w0.astype(mxu_dtype)
        w1 = w1.astype(mxu_dtype)
    aux = jnp.stack([b0, g, beta], axis=0)                                  # (3, H)
    w1p = jnp.zeros((H, c_pad), w1.dtype).at[:, :C].set(w1)                 # (H, Cpad)
    b1p = jnp.zeros((1, c_pad), b1.dtype).at[:, :C].set(b1.reshape(1, C))   # (1, Cpad)
    return {"w0": w0, "aux": aux, "w1p": w1p, "b1p": b1p}


@functools.partial(jax.jit, static_argnames=("num_classes", "block_rows"))
def pooler_end_logits(hidden_states, start_positions, prepared, num_classes,
                      block_rows=512):
    """hidden_states: [B, S, H1], start_positions: [B, S, H2], H1 + H2 == hidden_size."""
    w0, aux, w1p, b1p = (prepared["w0"], prepared["aux"],
                         prepared["w1p"], prepared["b1p"])
    B, S, H1 = hidden_states.shape
    H2 = start_positions.shape[-1]
    H = w0.shape[0]
    assert H1 + H2 == H, "concat width must equal hidden_size"
    c_pad = w1p.shape[1]

    N = B * S
    x1 = hidden_states.reshape(N, H1)
    x2 = start_positions.reshape(N, H2)

    # Row tile: large (MXU-friendly), but capped so there are at least two grid
    # steps whenever N allows -> both v7x TensorCores get work.
    block_rows = max(8, _round_up(block_rows, 8))
    tm = min(block_rows, max(8, _round_up(-(-N // 2), 8)))
    grid = (pl.cdiv(N, tm),)   # partial last block handled by masked row stores

    kernel = functools.partial(_pooler_end_logits_kernel, h1=H1)
    out = pl.pallas_call(
        kernel,
        out_shape=jax.ShapeDtypeStruct((N, c_pad), hidden_states.dtype),
        grid_spec=pltpu.PrefetchScalarGridSpec(
            num_scalar_prefetch=0,
            grid=grid,
            in_specs=[
                pl.BlockSpec((tm, H1), lambda i: (i, 0)),   # x1 tile (double-buffered)
                pl.BlockSpec((tm, H2), lambda i: (i, 0)),   # x2 tile (double-buffered)
                _const_spec((H, H)),                        # w0 (resident, 1 buffer)
                _const_spec((3, H)),                        # [b0; gamma; beta]
                _const_spec((H, c_pad)),                    # w1 (lane-padded)
                _const_spec((1, c_pad)),                    # b1 (lane-padded)
            ],
            out_specs=pl.BlockSpec((tm, c_pad), lambda i: (i, 0)),
        ),
        compiler_params=pltpu.CompilerParams(
            dimension_semantics=("parallel",),
            vmem_limit_bytes=_vmem_limit_bytes(),
        ),
    )(x1, x2, w0, aux, w1p, b1p)

    return out[:, :num_classes].reshape(B, S, num_classes)


def init_params(key, hidden_size, num_classes, dtype=jnp.float32):
    k0, k1, k2, k3 = jax.random.split(key, 4)
    # Weights stored pre-transposed: w0 is [in=H, out=H], w1 is [in=H, out=C].
    scale0 = 1.0 / jnp.sqrt(hidden_size)
    return {
        "w0": jax.random.uniform(k0, (hidden_size, hidden_size), dtype,
                                 minval=-scale0, maxval=scale0),
        "b0": jax.random.uniform(k1, (hidden_size,), dtype,
                                 minval=-scale0, maxval=scale0),
        "ln_g": jnp.ones((hidden_size,), dtype),
        "ln_b": jnp.zeros((hidden_size,), dtype),
        "w1": jax.random.uniform(k2, (hidden_size, num_classes), dtype,
                                 minval=-scale0, maxval=scale0),
        "b1": jax.random.uniform(k3, (num_classes,), dtype,
                                 minval=-scale0, maxval=scale0),
    }


def _reference(hidden_states, start_positions, params):
    """Pure-JAX reference (mirrors the torch forward)."""
    x = jnp.concatenate([hidden_states, start_positions], axis=-1)
    h = x @ params["w0"] + params["b0"]
    h = jnp.tanh(h)
    mean = jnp.mean(h, axis=-1, keepdims=True)
    var = jnp.mean((h - mean) ** 2, axis=-1, keepdims=True)
    h = (h - mean) / jnp.sqrt(var + 1e-5)
    h = h * params["ln_g"] + params["ln_b"]
    return h @ params["w1"] + params["b1"]


if __name__ == "__main__":
    key = jax.random.PRNGKey(0)
    B, S = 2, 8
    hidden_size, num_classes = 32, 4
    H_half = hidden_size // 2

    k_h, k_s, k_p = jax.random.split(key, 3)
    hidden_states = jax.random.normal(k_h, (B, S, H_half), jnp.float32)
    start_positions = jax.random.normal(k_s, (B, S, H_half), jnp.float32)
    params = init_params(k_p, hidden_size, num_classes)

    # One-time param prep (hoisted out of the per-call path). Pass
    # mxu_dtype=jnp.bfloat16 here for the bf16-MXU fast path on large H.
    prepared = prepare_params(params)

    out = pooler_end_logits(hidden_states, start_positions, prepared, num_classes)
    out = jax.block_until_ready(out)

    ref = _reference(hidden_states, start_positions, params)
    assert out.shape == (B, S, num_classes)
    assert jnp.allclose(out, ref, atol=1e-4, rtol=1e-4), "mismatch vs reference"

    print("KERNEL_OK")
</pallas_src>

<mosaic_0001>
module attributes {stable_mosaic.version = 11 : i64} {
  func.func @_pooler_end_logits_kernel(%arg0: i32, %arg1: memref<8x16xf32, #tpu.memory_space<vmem>>, %arg2: memref<8x16xf32, #tpu.memory_space<vmem>>, %arg3: memref<32x32xf32, #tpu.memory_space<vmem>>, %arg4: memref<3x32xf32, #tpu.memory_space<vmem>>, %arg5: memref<32x128xf32, #tpu.memory_space<vmem>>, %arg6: memref<1x128xf32, #tpu.memory_space<vmem>>, %arg7: memref<8x128xf32, #tpu.memory_space<vmem>>) attributes {dimension_semantics = [#tpu.dimension_semantics<parallel>], iteration_bounds = array<i64: 2>, scalar_prefetch = 0 : i64, scratch_operands = 0 : i64, tpu.core_type = #tpu.core_type<tc>, window_params = [{transform_indices = @transform_0, window_bounds = array<i64: 8, 16>}, {transform_indices = @transform_1, window_bounds = array<i64: 8, 16>}, {pipeline_mode = #tpu.pipeline_mode<synchronous>, transform_indices = @transform_2, window_bounds = array<i64: 32, 32>}, {pipeline_mode = #tpu.pipeline_mode<synchronous>, transform_indices = @transform_3, window_bounds = array<i64: 3, 32>}, {pipeline_mode = #tpu.pipeline_mode<synchronous>, transform_indices = @transform_4, window_bounds = array<i64: 32, 128>}, {pipeline_mode = #tpu.pipeline_mode<synchronous>, transform_indices = @transform_5, window_bounds = array<i64: 1, 128>}, {transform_indices = @transform_6, window_bounds = array<i64: 8, 128>}]} {
    %c0 = arith.constant 0 : index
    %c0_0 = arith.constant 0 : index
    %0 = vector.load %arg1[%c0, %c0_0] : memref<8x16xf32, #tpu.memory_space<vmem>>, vector<8x16xf32>
    %c0_1 = arith.constant 0 : index
    %c0_2 = arith.constant 0 : index
    %1 = vector.load %arg3[%c0_1, %c0_2] : memref<32x32xf32, #tpu.memory_space<vmem>>, vector<16x32xf32>
    %cst = arith.constant dense<0.000000e+00> : vector<8x32xf32>
    %2 = tpu.matmul %0, %1, %cst {dimension_numbers = #tpu.dot_dimension_numbers<[1], [0], [0], [1], [0, 0, 1, 1], [], []>} : vector<8x16xf32>, vector<16x32xf32>, vector<8x32xf32> -> vector<8x32xf32>
    %c0_3 = arith.constant 0 : index
    %c0_4 = arith.constant 0 : index
    %3 = vector.load %arg2[%c0_3, %c0_4] : memref<8x16xf32, #tpu.memory_space<vmem>>, vector<8x16xf32>
    %c16 = arith.constant 16 : index
    %c0_5 = arith.constant 0 : index
    %4 = vector.load %arg3[%c16, %c0_5] : memref<32x32xf32, #tpu.memory_space<vmem>>, vector<16x32xf32>
    %cst_6 = arith.constant dense<0.000000e+00> : vector<8x32xf32>
    %5 = tpu.matmul %3, %4, %cst_6 {dimension_numbers = #tpu.dot_dimension_numbers<[1], [0], [0], [1], [0, 0, 1, 1], [], []>} : vector<8x16xf32>, vector<16x32xf32>, vector<8x32xf32> -> vector<8x32xf32>
    %6 = arith.addf %2, %5 : vector<8x32xf32>
    %c0_7 = arith.constant 0 : index
    %c0_8 = arith.constant 0 : index
    %7 = vector.load %arg4[%c0_7, %c0_8] : memref<3x32xf32, #tpu.memory_space<vmem>>, vector<1x32xf32>
    %8 = vector.broadcast %7 : vector<1x32xf32> to vector<8x32xf32>
    %9 = arith.addf %6, %8 : vector<8x32xf32>
    %10 = math.tanh %9 : vector<8x32xf32>
    %cst_9 = arith.constant dense<0.000000e+00> : vector<8xf32>
    %11 = vector.multi_reduction <add>, %10, %cst_9 [1] : vector<8x32xf32> to vector<8xf32>
    %12 = vector.shape_cast %11 : vector<8xf32> to vector<8x1xf32>
    %cst_10 = arith.constant 3.125000e-02 : f32
    %13 = vector.broadcast %cst_10 : f32 to vector<8x1xf32>
    %14 = arith.mulf %12, %13 : vector<8x1xf32>
    %15 = vector.broadcast %14 : vector<8x1xf32> to vector<8x32xf32>
    %16 = arith.subf %10, %15 : vector<8x32xf32>
    %17 = arith.mulf %16, %16 : vector<8x32xf32>
    %cst_11 = arith.constant dense<0.000000e+00> : vector<8xf32>
    %18 = vector.multi_reduction <add>, %17, %cst_11 [1] : vector<8x32xf32> to vector<8xf32>
    %19 = vector.shape_cast %18 : vector<8xf32> to vector<8x1xf32>
    %cst_12 = arith.constant 3.125000e-02 : f32
    %20 = vector.broadcast %cst_12 : f32 to vector<8x1xf32>
    %21 = arith.mulf %19, %20 : vector<8x1xf32>
    %cst_13 = arith.constant 9.99999974E-6 : f32
    %22 = vector.broadcast %cst_13 : f32 to vector<8x1xf32>
    %23 = arith.addf %21, %22 : vector<8x1xf32>
    %24 = math.rsqrt %23 : vector<8x1xf32>
    %25 = vector.broadcast %24 : vector<8x1xf32> to vector<8x32xf32>
    %26 = arith.mulf %16, %25 : vector<8x32xf32>
    %c1 = arith.constant 1 : index
    %c0_14 = arith.constant 0 : index
    %27 = vector.load %arg4[%c1, %c0_14] : memref<3x32xf32, #tpu.memory_space<vmem>>, vector<1x32xf32>
    %28 = vector.broadcast %27 : vector<1x32xf32> to vector<8x32xf32>
    %29 = arith.mulf %26, %28 : vector<8x32xf32>
    %c2 = arith.constant 2 : index
    %c0_15 = arith.constant 0 : index
    %30 = vector.load %arg4[%c2, %c0_15] : memref<3x32xf32, #tpu.memory_space<vmem>>, vector<1x32xf32>
    %31 = vector.broadcast %30 : vector<1x32xf32> to vector<8x32xf32>
    %32 = arith.addf %29, %31 : vector<8x32xf32>
    %c0_16 = arith.constant 0 : index
    %c0_17 = arith.constant 0 : index
    %33 = vector.load %arg5[%c0_16, %c0_17] : memref<32x128xf32, #tpu.memory_space<vmem>>, vector<32x128xf32>
    %cst_18 = arith.constant dense<0.000000e+00> : vector<8x128xf32>
    %34 = tpu.matmul %32, %33, %cst_18 {dimension_numbers = #tpu.dot_dimension_numbers<[1], [0], [0], [1], [0, 0, 1, 1], [], []>} : vector<8x32xf32>, vector<32x128xf32>, vector<8x128xf32> -> vector<8x128xf32>
    %c0_19 = arith.constant 0 : index
    %c0_20 = arith.constant 0 : index
    %35 = vector.load %arg6[%c0_19, %c0_20] : memref<1x128xf32, #tpu.memory_space<vmem>>, vector<1x128xf32>
    %36 = vector.broadcast %35 : vector<1x128xf32> to vector<8x128xf32>
    %37 = arith.addf %34, %36 : vector<8x128xf32>
    %c0_21 = arith.constant 0 : index
    %c0_22 = arith.constant 0 : index
    %38 = vector.load %arg7[%c0_21, %c0_22] : memref<8x128xf32, #tpu.memory_space<vmem>>, vector<8x128xf32>
    tpu.vector_store %arg7[%c0_21, %c0_22], %37 {strides = array<i32>} : memref<8x128xf32, #tpu.memory_space<vmem>>, vector<8x128xf32>,
    return
  }
  func.func @transform_0(%arg0: i32) -> (i32, i32) {
    %c0_i32 = arith.constant 0 : i32
    %c0_i32_0 = arith.constant 0 : i32
    return %arg0, %c0_i32 : i32, i32
  }
  func.func @transform_1(%arg0: i32) -> (i32, i32) {
    %c0_i32 = arith.constant 0 : i32
    %c0_i32_0 = arith.constant 0 : i32
    return %arg0, %c0_i32 : i32, i32
  }
  func.func @transform_2(%arg0: i32) -> (i32, i32) {
    %c0_i32 = arith.constant 0 : i32
    %c0_i32_0 = arith.constant 0 : i32
    %c0_i32_1 = arith.constant 0 : i32
    return %c0_i32, %c0_i32_0 : i32, i32
  }
  func.func @transform_3(%arg0: i32) -> (i32, i32) {
    %c0_i32 = arith.constant 0 : i32
    %c0_i32_0 = arith.constant 0 : i32
    %c0_i32_1 = arith.constant 0 : i32
    return %c0_i32, %c0_i32_0 : i32, i32
  }
  func.func @transform_4(%arg0: i32) -> (i32, i32) {
    %c0_i32 = arith.constant 0 : i32
    %c0_i32_0 = arith.constant 0 : i32
    %c0_i32_1 = arith.constant 0 : i32
    return %c0_i32, %c0_i32_0 : i32, i32
  }
  func.func @transform_5(%arg0: i32) -> (i32, i32) {
    %c0_i32 = arith.constant 0 : i32
    %c0_i32_0 = arith.constant 0 : i32
    %c0_i32_1 = arith.constant 0 : i32
    return %c0_i32, %c0_i32_0 : i32, i32
  }
  func.func @transform_6(%arg0: i32) -> (i32, i32) {
    %c0_i32 = arith.constant 0 : i32
    %c0_i32_0 = arith.constant 0 : i32
    return %arg0, %c0_i32 : i32, i32
  }
}

</mosaic_0001>

<llo_original>
// kernel: pooler_end_logits.1
$region0: #{pooler_end_logits.1}
  #allocation0 [shape = 'u32[]', space=smem, size = 0x4, offset = 0x4, fixed_abs, tag = 'smem constant byte address 0x4 - core index']
  #allocation1 [shape = 'u32[144,128]{1,0:T(1,128)}', space=vmem, size = 0x12000, scoped, tag = 'internal scratch']
  %s0 = inlined_call_operand.hbm [shape: f32[16,16], index: 0, kind: input, shape index: {}]
  %s1 = inlined_call_operand.hbm [shape: f32[16,16], index: 1, kind: input, shape index: {}]
  %s2 = inlined_call_operand.hbm [shape: f32[32,32], index: 2, kind: input, shape index: {}]
  %s3 = inlined_call_operand.vmem [shape: f32[3,32], index: 3, kind: input, shape index: {}]
  %s4 = inlined_call_operand.hbm [shape: f32[32,128], index: 4, kind: input, shape index: {}]
  %s5 = inlined_call_operand.vmem [shape: f32[1,128], index: 5, kind: input, shape index: {}]
  %s6 = inlined_call_operand.vmem [shape: f32[16,128], index: 6, kind: output, shape index: {}]
  %s7 = sld [smem:[#allocation0]]
  $region73: #{pooler_end_logits.1} parent=0
    _
  %s9 = ssub.s32 1, %s7
  %s10 = scalar_select 0, %s9, %s7
  $region1: #{pooler_end_logits.1} parent=0
    #allocation2 [shape = 'u8[8192]{0}', space=vmem, size = 0x2000, scoped, tag = 'input window, operand 0']
    #allocation3 [shape = 's32[2]{0}', space=sflag, size = 0x8, scoped, tag = 'scoped memory for pooler_end_logits.1']
    #allocation4 [shape = 'u8[8192]{0}', space=vmem, size = 0x2000, scoped, tag = 'input window, operand 1']
    #allocation5 [shape = 's32[2]{0}', space=sflag, size = 0x8, scoped, tag = 'scoped memory for pooler_end_logits.1']
    #allocation6 [shape = 'u8[16384]{0}', space=vmem, size = 0x4000, scoped, tag = 'input window, operand 2, single buffered']
    #allocation7 [shape = 'u8[16384]{0}', space=vmem, size = 0x4000, scoped, tag = 'input window, operand 4, single buffered']
    #allocation8 [shape = 's32[1]{0}', space=sflag, size = 0x4, scoped, tag = 'scoped memory for pooler_end_logits.1']
    %11 = vsyncpa [#allocation3], 0
    %s12 = scalar_lea.sflag [#allocation3], 1
    %13 = vsyncpa %s12, 0
    %14 = vsyncpa [#allocation5], 0
    %s15 = scalar_lea.sflag [#allocation5], 1
    %16 = vsyncpa %s15, 0
    %17 = vsyncpa [#allocation8], 0
    loop: start=0, step=1, limit=4
    $region2: #{pooler_end_logits.1} parent=1 // loop_pre_header
      _
    $region3: #{pooler_end_logits.1} parent=1 // loop_header
      %s19 = sphi 0, %s23
      %p20 = scmp.ge.s32.totalorder %s19, 4
      %s29 = sphi 0, %s31
      %s32 = sphi 0, %s29
      %s33 = sphi 0, %s32
      %s49 = sphi 0, %s33
      %s55 = sphi 0, %s57
      %s58 = sphi 0, %s55
      %s59 = sphi 0, %s58
      %s75 = sphi 0, %s59
      %s79 = sphi 0, %s79
      %s81 = sphi 0, %s79
      %s82 = sphi 0, %s81
      %s96 = sphi 0, %s82
      %s100 = sphi 0, %s100
      %s102 = sphi 0, %s100
      %s103 = sphi 0, %s102
      %s117 = sphi 0, %s103
      %s121 = sphi 0, %s121
      %s123 = sphi 0, %s121
      %s124 = sphi 0, %s123
      %s138 = sphi 0, %s124
      %s142 = sphi 0, %s142
      %s144 = sphi 0, %s142
      %s145 = sphi 0, %s144
      %s159 = sphi 0, %s145
      %s165 = sphi 0, %s167
      %s168 = sphi 0, %s165
      %s169 = sphi 0, %s168
      %s185 = sphi 0, %s169
    $region4: #{pooler_end_logits.1} parent=1 // loop_header_branch
      %22 = sbr.rel (%p20) target = $region8
    $region5: #{pooler_end_logits.1} parent=1 // loop_body
      %s24 = ssub.s32 %s19, 1
      %s25 = ssub.s32 %s19, 2
      %s26 = sadd.s32 %s19, 1
      %s27 = ssub.s32 %s19, %s26
      %p28 = scmp.eq.s32.totalorder %s27, 0
      %s30 = sadd.s32 %s29, 1
      %s31 = scalar_select %p28, %s29, %s30
      %p34 = pneg %p28
      %p35 = scmp.eq.s32.totalorder %s19, 1
      %p36 = por %p34, %p35
      %p37 = scmp.ne.s32.totalorder %s29, %s32
      %p38 = scmp.eq.s32.totalorder %s19, 0
      %p39 = por %p37, %p38
      %p40 = scmp.ne.s32.totalorder %s29, %s32
      %p41 = scmp.eq.s32.totalorder %s24, 1
      %p42 = por %p40, %p41
      %p43 = scmp.ne.s32.totalorder %s32, %s33
      %p44 = scmp.eq.s32.totalorder %s24, 0
      %p45 = por %p43, %p44
      %p46 = scmp.ne.s32.totalorder %s32, %s33
      %p47 = scmp.eq.s32.totalorder %s25, 1
      %p48 = por %p46, %p47
      %p50 = scmp.ne.s32.totalorder %s33, %s49
      %p51 = scmp.eq.s32.totalorder %s25, 0
      %p52 = por %p50, %p51
      %s53 = ssub.s32 %s19, %s26
      %p54 = scmp.eq.s32.totalorder %s53, 0
      %s56 = sadd.s32 %s55, 1
      %s57 = scalar_select %p54, %s55, %s56
      %p60 = pneg %p54
      %p61 = scmp.eq.s32.totalorder %s19, 1
      %p62 = por %p60, %p61
      %p63 = scmp.ne.s32.totalorder %s55, %s58
      %p64 = scmp.eq.s32.totalorder %s19, 0
      %p65 = por %p63, %p64
      %p66 = scmp.ne.s32.totalorder %s55, %s58
      %p67 = scmp.eq.s32.totalorder %s24, 1
      %p68 = por %p66, %p67
      %p69 = scmp.ne.s32.totalorder %s58, %s59
      %p70 = scmp.eq.s32.totalorder %s24, 0
      %p71 = por %p69, %p70
      %p72 = scmp.ne.s32.totalorder %s58, %s59
      %p73 = scmp.eq.s32.totalorder %s25, 1
      %p74 = por %p72, %p73
      %p76 = scmp.ne.s32.totalorder %s59, %s75
      %p77 = scmp.eq.s32.totalorder %s25, 0
      %p78 = por %p76, %p77
      %s80 = sadd.s32 %s79, 1
      %p83 = scmp.eq.s32.totalorder %s19, 1
      %p84 = scmp.ne.s32.totalorder %s79, %s81
      %p85 = scmp.eq.s32.totalorder %s19, 0
      %p86 = por %p84, %p85
      %p87 = scmp.ne.s32.totalorder %s79, %s81
      %p88 = scmp.eq.s32.totalorder %s24, 1
      %p89 = por %p87, %p88
      %p90 = scmp.ne.s32.totalorder %s81, %s82
      %p91 = scmp.eq.s32.totalorder %s24, 0
      %p92 = por %p90, %p91
      %p93 = scmp.ne.s32.totalorder %s81, %s82
      %p94 = scmp.eq.s32.totalorder %s25, 1
      %p95 = por %p93, %p94
      %p97 = scmp.ne.s32.totalorder %s82, %s96
      %p98 = scmp.eq.s32.totalorder %s25, 0
      %p99 = por %p97, %p98
      %s101 = sadd.s32 %s100, 1
      %p104 = scmp.eq.s32.totalorder %s19, 1
      %p105 = scmp.ne.s32.totalorder %s100, %s102
      %p106 = scmp.eq.s32.totalorder %s19, 0
      %p107 = por %p105, %p106
      %p108 = scmp.ne.s32.totalorder %s100, %s102
      %p109 = scmp.eq.s32.totalorder %s24, 1
      %p110 = por %p108, %p109
      %p111 = scmp.ne.s32.totalorder %s102, %s103
      %p112 = scmp.eq.s32.totalorder %s24, 0
      %p113 = por %p111, %p112
      %p114 = scmp.ne.s32.totalorder %s102, %s103
      %p115 = scmp.eq.s32.totalorder %s25, 1
      %p116 = por %p114, %p115
      %p118 = scmp.ne.s32.totalorder %s103, %s117
      %p119 = scmp.eq.s32.totalorder %s25, 0
      %p120 = por %p118, %p119
      %s122 = sadd.s32 %s121, 1
      %p125 = scmp.eq.s32.totalorder %s19, 1
      %p126 = scmp.ne.s32.totalorder %s121, %s123
      %p127 = scmp.eq.s32.totalorder %s19, 0
      %p128 = por %p126, %p127
      %p129 = scmp.ne.s32.totalorder %s121, %s123
      %p130 = scmp.eq.s32.totalorder %s24, 1
      %p131 = por %p129, %p130
      %p132 = scmp.ne.s32.totalorder %s123, %s124
      %p133 = scmp.eq.s32.totalorder %s24, 0
      %p134 = por %p132, %p133
      %p135 = scmp.ne.s32.totalorder %s123, %s124
      %p136 = scmp.eq.s32.totalorder %s25, 1
      %p137 = por %p135, %p136
      %p139 = scmp.ne.s32.totalorder %s124, %s138
      %p140 = scmp.eq.s32.totalorder %s25, 0
      %p141 = por %p139, %p140
      %s143 = sadd.s32 %s142, 1
      %p146 = scmp.eq.s32.totalorder %s19, 1
      %p147 = scmp.ne.s32.totalorder %s142, %s144
      %p148 = scmp.eq.s32.totalorder %s19, 0
      %p149 = por %p147, %p148
      %p150 = scmp.ne.s32.totalorder %s142, %s144
      %p151 = scmp.eq.s32.totalorder %s24, 1
      %p152 = por %p150, %p151
      %p153 = scmp.ne.s32.totalorder %s144, %s145
      %p154 = scmp.eq.s32.totalorder %s24, 0
      %p155 = por %p153, %p154
      %p156 = scmp.ne.s32.totalorder %s144, %s145
      %p157 = scmp.eq.s32.totalorder %s25, 1
      %p158 = por %p156, %p157
      %p160 = scmp.ne.s32.totalorder %s145, %s159
      %p161 = scmp.eq.s32.totalorder %s25, 0
      %p162 = por %p160, %p161
      %s163 = ssub.s32 %s19, %s26
      %p164 = scmp.eq.s32.totalorder %s163, 0
      %s166 = sadd.s32 %s165, 1
      %s167 = scalar_select %p164, %s165, %s166
      %p170 = pneg %p164
      %p171 = scmp.eq.s32.totalorder %s19, 1
      %p172 = por %p170, %p171
      %p173 = scmp.ne.s32.totalorder %s165, %s168
      %p174 = scmp.eq.s32.totalorder %s19, 0
      %p175 = por %p173, %p174
      %p176 = scmp.ne.s32.totalorder %s165, %s168
      %p177 = scmp.eq.s32.totalorder %s24, 1
      %p178 = por %p176, %p177
      %p179 = scmp.ne.s32.totalorder %s168, %s169
      %p180 = scmp.eq.s32.totalorder %s24, 0
      %p181 = por %p179, %p180
      %p182 = scmp.ne.s32.totalorder %s168, %s169
      %p183 = scmp.eq.s32.totalorder %s25, 1
      %p184 = por %p182, %p183
      %p186 = scmp.ne.s32.totalorder %s169, %s185
      %p187 = scmp.eq.s32.totalorder %s25, 0
      %p188 = por %p186, %p187
      %p189 = scmp.le.s32.totalorder 1, %s19
      %p190 = scmp.lt.s32.totalorder %s19, 3
      %p191 = pnand %p189, %p190
      %p192 = pneg %p191
      // Predicated region
      $region9: #{pooler_end_logits.1} parent=5 // pred_check
        _
      $region10: #{pooler_end_logits.1} parent=5 // pred_check_branch
        %194 = sbr.rel (%p191) target = $region12
      $region11: #{pooler_end_logits.1} parent=5 // pred_region
        %s195 = ssub.s32 %s19, 1
        // Predicated region
        $region13: #{pooler_end_logits.1} parent=11 // pred_check
          %p196 = pneg %p92
        $region14: #{pooler_end_logits.1} parent=11 // pred_check_branch
          %198 = sbr.rel (%p196) target = $region16
        $region15: #{pooler_end_logits.1} parent=11 // pred_region
          %s200 = ssub.s32 512, 512
          %201 = vsyncadd [#allocation5], %s200
          %s202 = sshll.u32 [#allocation6], 4
          %s203 = int_to_ptr.vmem [resolvable:$true] %s202
          %208 = dma.hbm_to_vmem [thread:$0]  %s2, 512, %s203, [#allocation5], 128, 128, 8
        $region16: #{pooler_end_logits.1} parent=11 // pred_fallthru
          _
        // Predicated region
        $region17: #{pooler_end_logits.1} parent=11 // pred_check
          %p209 = pneg %p113
        $region18: #{pooler_end_logits.1} parent=11 // pred_check_branch
          %211 = sbr.rel (%p209) target = $region20
        $region19: #{pooler_end_logits.1} parent=11 // pred_region
          _
        $region20: #{pooler_end_logits.1} parent=11 // pred_fallthru
          _
        // Predicated region
        $region21: #{pooler_end_logits.1} parent=11 // pred_check
          %p212 = pneg %p134
        $region22: #{pooler_end_logits.1} parent=11 // pred_check_branch
          %214 = sbr.rel (%p212) target = $region24
        $region23: #{pooler_end_logits.1} parent=11 // pred_region
          %s216 = ssub.s32 512, 512
          %217 = vsyncadd [#allocation8], %s216
          %s218 = sshll.u32 [#allocation7], 4
          %s219 = int_to_ptr.vmem [resolvable:$true] %s218
          %224 = dma.hbm_to_vmem [thread:$0]  %s4, 512, %s219, [#allocation8], 128, 128, 8
        $region24: #{pooler_end_logits.1} parent=11 // pred_fallthru
          _
        // Predicated region
        $region25: #{pooler_end_logits.1} parent=11 // pred_check
          %p225 = pneg %p155
        $region26: #{pooler_end_logits.1} parent=11 // pred_check_branch
          %227 = sbr.rel (%p225) target = $region28
        $region27: #{pooler_end_logits.1} parent=11 // pred_region
          _
        $region28: #{pooler_end_logits.1} parent=11 // pred_fallthru
          _
      $region12: #{pooler_end_logits.1} parent=5 // pred_fallthru
        _
      %p228 = scmp.lt.s32.totalorder %s19, 2
      // Predicated region
      $region29: #{pooler_end_logits.1} parent=5 // pred_check
        %p229 = pneg %p228
      $region30: #{pooler_end_logits.1} parent=5 // pred_check_branch
        %231 = sbr.rel (%p229) target = $region32
      $region31: #{pooler_end_logits.1} parent=5 // pred_region
        // Predicated region
        $region33: #{pooler_end_logits.1} parent=31 // pred_check
          %p232 = pneg %p39
        $region34: #{pooler_end_logits.1} parent=31 // pred_check_branch
          %234 = sbr.rel (%p232) target = $region36
        $region35: #{pooler_end_logits.1} parent=31 // pred_region
          %s235 = sand.u32 %s29, 1
          %s236 = scalar_lea.sflag [#allocation3], %s235
          %s237 = sand.u32 %s29, 1
          %s238 = smul.addr %s237, 8
          %s239 = scalar_lea.vmem [#allocation2], %s238
          %s241 = ssub.s32 128, 128
          %242 = vsyncadd %s236, %s241
          %s243 = smul.addr %s19, 128
          %s244 = scalar_lea.hbm %s0, %s243
          %s246 = sshll.u32 %s239, 4
          %s247 = int_to_ptr.vmem [resolvable:$true] %s246
          %249 = dma.hbm_to_vmem [thread:$0]  %s244, 128, %s247, %s236
        $region36: #{pooler_end_logits.1} parent=31 // pred_fallthru
          _
        // Predicated region
        $region37: #{pooler_end_logits.1} parent=31 // pred_check
          %p250 = pneg %p65
        $region38: #{pooler_end_logits.1} parent=31 // pred_check_branch
          %252 = sbr.rel (%p250) target = $region40
        $region39: #{pooler_end_logits.1} parent=31 // pred_region
          %s253 = sand.u32 %s19, 1
          %s254 = scalar_lea.sflag [#allocation5], %s253
          %s255 = sand.u32 %s55, 1
          %s256 = smul.addr %s255, 8
          %s257 = scalar_lea.vmem [#allocation4], %s256
          %s259 = ssub.s32 128, 128
          %260 = vsyncadd %s254, %s259
          %s261 = smul.addr %s19, 128
          %s262 = scalar_lea.hbm %s1, %s261
          %s264 = sshll.u32 %s257, 4
          %s265 = int_to_ptr.vmem [resolvable:$true] %s264
          %267 = dma.hbm_to_vmem [thread:$0]  %s262, 128, %s265, %s254
        $region40: #{pooler_end_logits.1} parent=31 // pred_fallthru
          _
      $region32: #{pooler_end_logits.1} parent=5 // pred_fallthru
        _
      %p268 = scmp.le.s32.totalorder 1, %s19
      %p269 = scmp.lt.s32.totalorder %s19, 3
      %p270 = pnand %p268, %p269
      %p271 = pneg %p270
      // Predicated region
      $region41: #{pooler_end_logits.1} parent=5 // pred_check
        _
      $region42: #{pooler_end_logits.1} parent=5 // pred_check_branch
        %273 = sbr.rel (%p270) target = $region44
      $region43: #{pooler_end_logits.1} parent=5 // pred_region
        %s274 = ssub.s32 %s19, 1
        %s275 = sand.u32 %s32, 1
        %s276 = scalar_lea.sflag [#allocation3], %s275
        %s277 = sand.u32 %s32, 1
        %s278 = smul.addr %s277, 8
        %s279 = scalar_lea.vmem [#allocation2], %s278
        // Predicated region
        $region45: #{pooler_end_logits.1} parent=43 // pred_check
          %p280 = pneg %p45
        $region46: #{pooler_end_logits.1} parent=43 // pred_check_branch
          %282 = sbr.rel (%p280) target = $region48
        $region47: #{pooler_end_logits.1} parent=43 // pred_region
          %283 = dma.done %s276, 128
        $region48: #{pooler_end_logits.1} parent=43 // pred_fallthru
          _
        %s284 = sand.u32 %s24, 1
        %s285 = scalar_lea.sflag [#allocation5], %s284
        %s286 = sand.u32 %s58, 1
        %s287 = smul.addr %s286, 8
        %s288 = scalar_lea.vmem [#allocation4], %s287
        // Predicated region
        $region49: #{pooler_end_logits.1} parent=43 // pred_check
          %p289 = pneg %p71
        $region50: #{pooler_end_logits.1} parent=43 // pred_check_branch
          %291 = sbr.rel (%p289) target = $region52
        $region51: #{pooler_end_logits.1} parent=43 // pred_region
          %292 = dma.done %s285, 128
        $region52: #{pooler_end_logits.1} parent=43 // pred_fallthru
          _
        // Predicated region
        $region53: #{pooler_end_logits.1} parent=43 // pred_check
          %p293 = pneg %p92
        $region54: #{pooler_end_logits.1} parent=43 // pred_check_branch
          %295 = sbr.rel (%p293) target = $region56
        $region55: #{pooler_end_logits.1} parent=43 // pred_region
          %296 = dma.done [#allocation5], 512
        $region56: #{pooler_end_logits.1} parent=43 // pred_fallthru
          _
        // Predicated region
        $region57: #{pooler_end_logits.1} parent=43 // pred_check
          %p297 = pneg %p134
        $region58: #{pooler_end_logits.1} parent=43 // pred_check_branch
          %299 = sbr.rel (%p297) target = $region60
        $region59: #{pooler_end_logits.1} parent=43 // pred_region
          %300 = dma.done [#allocation8], 512
        $region60: #{pooler_end_logits.1} parent=43 // pred_fallthru
          _
        %s301 = sand.u32 %s32, 1
        %s302 = scalar_lea.sflag [#allocation3], %s301
        %s303 = sand.u32 %s32, 1
        %s304 = smul.addr %s303, 8
        %s305 = scalar_lea.vmem [#allocation2], %s304
        %p306 = pneg %p45
        %p307 = pneg %p42
        %s308 = sand.u32 %s24, 1
        %s309 = scalar_lea.sflag [#allocation5], %s308
        %s310 = sand.u32 %s58, 1
        %s311 = smul.addr %s310, 8
        %s312 = scalar_lea.vmem [#allocation4], %s311
        %p313 = pneg %p71
        %p314 = pneg %p68
        %p315 = pneg %p92
        %p316 = pneg %p89
        %p317 = pneg %p113
        %p318 = pneg %p110
        %p319 = pneg %p134
        %p320 = pneg %p131
        %p321 = pneg %p155
        %p322 = pneg %p152
        %p323 = pneg %p181
        %p324 = pneg %p178
        %p325 = scmp.lt.s32.totalorder %s24, 1
        %s326 = scalar_select %p325, %s24, 1
        %s327 = smul.addr %s326, 8
        %s328 = scalar_lea.vmem %s6, %s327
        %p329 = scmp.lt.s32.totalorder %s24, 1
        %s330 = scalar_select %p329, %s24, 1
        %s331 = smul.addr %s330, 8
        %s332 = scalar_lea.vmem %s6, %s331
        %v333 = vld [vmem:[%s279] sm:$0xff]
        %v334 = vld [vmem:[#allocation6] sm:$0xff]
        %v335 = vld [vmem:[#allocation6 + $0x8] sm:$0xff]
        %v336 = vld [vmem:[%s288] sm:$0xff]
        %v337 = vld [vmem:[#allocation6 + $0x10] sm:$0xff]
        %v338 = vld [vmem:[#allocation6 + $0x18] sm:$0xff]
        %vm339 = vcmask 130048
        %v341 = vsel %vm339, %v336, 0
        %343 = vmatprep.subr.mxu0 0.0
        %344 = vmatpush1.msra.mxu0 %v337
        %345 = vmatprep.subr.mxu0 0.0
        %346 = vmatpush1.msra.mxu0 %v338
        %347 = vmatprep.subr.mxu0 0.0
        %348 = vmatpush1.msra.mxu0 0.0
        %349 = vmatprep.subr.mxu0 0.0
        %350 = vmatpush1.msra.mxu0 0.0
        %351 = vmatprep.subr.mxu0 0.0
        %352 = vmatpush1.msra.mxu0 0.0
        %353 = vmatprep.subr.mxu0 0.0
        %354 = vmatpush1.msra.mxu0 0.0
        %355 = vmatprep.subr.mxu0 0.0
        %356 = vmatpush1.msra.mxu0 0.0
        %357 = vmatprep.subr.mxu0 0.0
        %358 = vmatpush1.msra.mxu0 0.0
        %359 = vmatprep.subr.mxu0 0.0
        %360 = vmatpush1.msra.mxu0 0.0
        %361 = vmatprep.subr.mxu0 0.0
        %362 = vmatpush1.msra.mxu0 0.0
        %363 = vmatprep.subr.mxu0 0.0
        %364 = vmatpush1.msra.mxu0 0.0
        %365 = vmatprep.subr.mxu0 0.0
        %366 = vmatpush1.msra.mxu0 0.0
        %367 = vmatprep.subr.mxu0 0.0
        %368 = vmatpush1.msra.mxu0 0.0
        %369 = vmatprep.subr.mxu0 0.0
        %370 = vmatpush1.msra.mxu0 0.0
        %371 = vmatprep.subr.mxu0 0.0
        %372 = vmatpush1.msra.mxu0 0.0
        %373 = vmatprep.subr.mxu0 0.0
        %374 = vmatpush1.msra.mxu0 0.0
        %375 = vmatprep.subr.mxu0 0.0
        %376 = vmatpush1.msra.mxu0 0.0
        %377 = vmatprep.subr.mxu0 0.0
        %378 = vmatpush1.msra.mxu0 0.0
        %379 = vmatprep.subr.mxu0 0.0
        %380 = vmatpush1.msra.mxu0 0.0
        %381 = vmatprep.subr.mxu0 0.0
        %382 = vmatpush1.msra.mxu0 0.0
        %383 = vmatprep.subr.mxu0 0.0
        %384 = vmatpush1.msra.mxu0 0.0
        %385 = vmatprep.subr.mxu0 0.0
        %386 = vmatpush1.msra.mxu0 0.0
        %387 = vmatprep.subr.mxu0 0.0
        %388 = vmatpush1.msra.mxu0 0.0
        %389 = vmatprep.subr.mxu0 0.0
        %390 = vmatpush1.msra.mxu0 0.0
        %391 = vmatprep.subr.mxu0 0.0
        %392 = vmatpush1.msra.mxu0 0.0
        %393 = vmatprep.subr.mxu0 0.0
        %394 = vmatpush1.msra.mxu0 0.0
        %395 = vmatprep.subr.mxu0 0.0
        %396 = vmatpush1.msra.mxu0 0.0
        %397 = vmatprep.subr.mxu0 0.0
        %398 = vmatpush1.msra.mxu0 0.0
        %399 = vmatprep.subr.mxu0 0.0
        %400 = vmatpush1.msra.mxu0 0.0
        %401 = vmatprep.subr.mxu0 0.0
        %402 = vmatpush1.msra.mxu0 0.0
        %403 = vmatprep.subr.mxu0 0.0
        %404 = vmatpush1.msra.mxu0 0.0
        %405 = vmatprep.subr.mxu0 0.0
        %406 = vmatpush1.msra.mxu0 0.0
        %407 = vmatprep.mubr.f32.mxu0 0.0
        %408 = vmatmul.mubr.f32.gmra.mrb[0].mxu0 %v341
        %v409 = vpop.f32.mrb[0].mxu0
        %v410 = vadd.f32 0.0, %v409
        %v411 = vpop.f32.mrb[0].mxu0
        %412 = vdwg.mxu0
        %v414 = vsel %vm339, %v333, 0
        %416 = vmatprep.subr.mxu0 0.0
        %417 = vmatpush1.msra.mxu0 %v334
        %418 = vmatprep.subr.mxu0 0.0
        %419 = vmatpush1.msra.mxu0 %v335
        %420 = vmatprep.subr.mxu0 0.0
        %421 = vmatpush1.msra.mxu0 0.0
        %422 = vmatprep.subr.mxu0 0.0
        %423 = vmatpush1.msra.mxu0 0.0
        %424 = vmatprep.subr.mxu0 0.0
        %425 = vmatpush1.msra.mxu0 0.0
        %426 = vmatprep.subr.mxu0 0.0
        %427 = vmatpush1.msra.mxu0 0.0
        %428 = vmatprep.subr.mxu0 0.0
        %429 = vmatpush1.msra.mxu0 0.0
        %430 = vmatprep.subr.mxu0 0.0
        %431 = vmatpush1.msra.mxu0 0.0
        %432 = vmatprep.subr.mxu0 0.0
        %433 = vmatpush1.msra.mxu0 0.0
        %434 = vmatprep.subr.mxu0 0.0
        %435 = vmatpush1.msra.mxu0 0.0
        %436 = vmatprep.subr.mxu0 0.0
        %437 = vmatpush1.msra.mxu0 0.0
        %438 = vmatprep.subr.mxu0 0.0
        %439 = vmatpush1.msra.mxu0 0.0
        %440 = vmatprep.subr.mxu0 0.0
        %441 = vmatpush1.msra.mxu0 0.0
        %442 = vmatprep.subr.mxu0 0.0
        %443 = vmatpush1.msra.mxu0 0.0
        %444 = vmatprep.subr.mxu0 0.0
        %445 = vmatpush1.msra.mxu0 0.0
        %446 = vmatprep.subr.mxu0 0.0
        %447 = vmatpush1.msra.mxu0 0.0
        %448 = vmatprep.subr.mxu0 0.0
        %449 = vmatpush1.msra.mxu0 0.0
        %450 = vmatprep.subr.mxu0 0.0
        %451 = vmatpush1.msra.mxu0 0.0
        %452 = vmatprep.subr.mxu0 0.0
        %453 = vmatpush1.msra.mxu0 0.0
        %454 = vmatprep.subr.mxu0 0.0
        %455 = vmatpush1.msra.mxu0 0.0
        %456 = vmatprep.subr.mxu0 0.0
        %457 = vmatpush1.msra.mxu0 0.0
        %458 = vmatprep.subr.mxu0 0.0
        %459 = vmatpush1.msra.mxu0 0.0
        %460 = vmatprep.subr.mxu0 0.0
        %461 = vmatpush1.msra.mxu0 0.0
        %462 = vmatprep.subr.mxu0 0.0
        %463 = vmatpush1.msra.mxu0 0.0
        %464 = vmatprep.subr.mxu0 0.0
        %465 = vmatpush1.msra.mxu0 0.0
        %466 = vmatprep.subr.mxu0 0.0
        %467 = vmatpush1.msra.mxu0 0.0
        %468 = vmatprep.subr.mxu0 0.0
        %469 = vmatpush1.msra.mxu0 0.0
        %470 = vmatprep.subr.mxu0 0.0
        %471 = vmatpush1.msra.mxu0 0.0
        %472 = vmatprep.subr.mxu0 0.0
        %473 = vmatpush1.msra.mxu0 0.0
        %474 = vmatprep.subr.mxu0 0.0
        %475 = vmatpush1.msra.mxu0 0.0
        %476 = vmatprep.subr.mxu0 0.0
        %477 = vmatpush1.msra.mxu0 0.0
        %478 = vmatprep.subr.mxu0 0.0
        %479 = vmatpush1.msra.mxu0 0.0
        %480 = vmatprep.mubr.f32.mxu0 0.0
        %481 = vmatmul.mubr.f32.gmra.mrb[0].mxu0 %v414
        %v482 = vpop.f32.mrb[0].mxu0
        %v483 = vadd.f32 %v410, %v482
        %v484 = vpop.f32.mrb[0].mxu0
        %485 = vdwg.mxu0
        %v486 = vld [vmem:[%s3] sm:$0x1]
        %v487 = vlaneseq
        %v488 = vshrl.u32 %v487, 7
        %v489 = vsub.s32 0, %v488
        %v490 = vrot.slane %v486, %v489
        %v491 = vadd.f32 %v483, %v490
        %v492 = vtanh.pop %v491
        %vm493 = vcmask 261120
        %v494 = vsel %vm493, %v492, 0.0
        %495 = vadd.xlane.f32.xlu0 %v494
        %v496 = vpop.xlane.xlu0 %495
        %v497 = vmul.f32 %v496, 0.03125
        %v498 = vsub.f32 %v492, %v497
        %v499 = vmul.f32 %v498, %v498
        %v500 = vsel %vm493, %v499, 0.0
        %501 = vadd.xlane.f32.xlu0 %v500
        %v502 = vpop.xlane.xlu0 %501
        %v503 = vmul.f32 %v502, 0.03125
        %v504 = vadd.f32 %v503, 1e-05
        %v505 = vrsqrt.pop %v504
        %v506 = vmul.f32 %v498, %v505
        %v507 = vld [vmem:[%s3 + $0x1] sm:$0x1]
        %v508 = vlaneseq
        %v509 = vshrl.u32 %v508, 7
        %v510 = vsub.s32 0, %v509
        %v511 = vrot.slane %v507, %v510
        %v512 = vmul.f32 %v506, %v511
        %v513 = vld [vmem:[%s3 + $0x2] sm:$0x1]
        %v514 = vlaneseq
        %v515 = vshrl.u32 %v514, 7
        %v516 = vsub.s32 0, %v515
        %v517 = vrot.slane %v513, %v516
        %v518 = vadd.f32 %v512, %v517
        %v519 = vld [vmem:[#allocation7] sm:$0xff]
        %v520 = vld [vmem:[#allocation7 + $0x8] sm:$0xff]
        %v521 = vld [vmem:[#allocation7 + $0x10] sm:$0xff]
        %v522 = vld [vmem:[#allocation7 + $0x18] sm:$0xff]
        %v523 = vld [vmem:[%s5] sm:$0x1]
        %v525 = vlaneseq
        %v526 = vshrl.u32 %v525, 7
        %v527 = vsub.s32 0, %v526
        %v528 = vrot.slane %v523, %v527
        %v531 = vsel %vm493, %v518, 0
        %533 = vmatprep.subr.mxu0 0.0
        %534 = vmatpush1.msra.mxu0 %v519
        %535 = vmatprep.subr.mxu0 0.0
        %536 = vmatpush1.msra.mxu0 %v520
        %537 = vmatprep.subr.mxu0 0.0
        %538 = vmatpush1.msra.mxu0 %v521
        %539 = vmatprep.subr.mxu0 0.0
        %540 = vmatpush1.msra.mxu0 %v522
        %541 = vmatprep.subr.mxu0 0.0
        %542 = vmatpush1.msra.mxu0 0.0
        %543 = vmatprep.subr.mxu0 0.0
        %544 = vmatpush1.msra.mxu0 0.0
        %545 = vmatprep.subr.mxu0 0.0
        %546 = vmatpush1.msra.mxu0 0.0
        %547 = vmatprep.subr.mxu0 0.0
        %548 = vmatpush1.msra.mxu0 0.0
        %549 = vmatprep.subr.mxu0 0.0
        %550 = vmatpush1.msra.mxu0 0.0
        %551 = vmatprep.subr.mxu0 0.0
        %552 = vmatpush1.msra.mxu0 0.0
        %553 = vmatprep.subr.mxu0 0.0
        %554 = vmatpush1.msra.mxu0 0.0
        %555 = vmatprep.subr.mxu0 0.0
        %556 = vmatpush1.msra.mxu0 0.0
        %557 = vmatprep.subr.mxu0 0.0
        %558 = vmatpush1.msra.mxu0 0.0
        %559 = vmatprep.subr.mxu0 0.0
        %560 = vmatpush1.msra.mxu0 0.0
        %561 = vmatprep.subr.mxu0 0.0
        %562 = vmatpush1.msra.mxu0 0.0
        %563 = vmatprep.subr.mxu0 0.0
        %564 = vmatpush1.msra.mxu0 0.0
        %565 = vmatprep.subr.mxu0 0.0
        %566 = vmatpush1.msra.mxu0 0.0
        %567 = vmatprep.subr.mxu0 0.0
        %568 = vmatpush1.msra.mxu0 0.0
        %569 = vmatprep.subr.mxu0 0.0
        %570 = vmatpush1.msra.mxu0 0.0
        %571 = vmatprep.subr.mxu0 0.0
        %572 = vmatpush1.msra.mxu0 0.0
        %573 = vmatprep.subr.mxu0 0.0
        %574 = vmatpush1.msra.mxu0 0.0
        %575 = vmatprep.subr.mxu0 0.0
        %576 = vmatpush1.msra.mxu0 0.0
        %577 = vmatprep.subr.mxu0 0.0
        %578 = vmatpush1.msra.mxu0 0.0
        %579 = vmatprep.subr.mxu0 0.0
        %580 = vmatpush1.msra.mxu0 0.0
        %581 = vmatprep.subr.mxu0 0.0
        %582 = vmatpush1.msra.mxu0 0.0
        %583 = vmatprep.subr.mxu0 0.0
        %584 = vmatpush1.msra.mxu0 0.0
        %585 = vmatprep.subr.mxu0 0.0
        %586 = vmatpush1.msra.mxu0 0.0
        %587 = vmatprep.subr.mxu0 0.0
        %588 = vmatpush1.msra.mxu0 0.0
        %589 = vmatprep.subr.mxu0 0.0
        %590 = vmatpush1.msra.mxu0 0.0
        %591 = vmatprep.subr.mxu0 0.0
        %592 = vmatpush1.msra.mxu0 0.0
        %593 = vmatprep.subr.mxu0 0.0
        %594 = vmatpush1.msra.mxu0 0.0
        %595 = vmatprep.subr.mxu0 0.0
        %596 = vmatpush1.msra.mxu0 0.0
        %597 = vmatprep.mubr.f32.mxu0 0.0
        %598 = vmatmul.mubr.f32.gmra.mrb[0].mxu0 %v531
        %v599 = vpop.f32.mrb[0].mxu0
        %v600 = vadd.f32 %v528, %v599
        %v601 = vpop.f32.mrb[0].mxu0
        %602 = vdwg.mxu0
        %603 = vst [vmem:[%s332] sm:$0xff] %v600
        %p604 = scmp.lt.s32.totalorder %s24, 1
        %s605 = scalar_select %p604, %s24, 1
        %s606 = smul.addr %s605, 8
        %s607 = scalar_lea.vmem %s6, %s606
        // Predicated region
        $region61: #{pooler_end_logits.1} parent=43 // pred_check
          %p608 = pneg %p178
        $region62: #{pooler_end_logits.1} parent=43 // pred_check_branch
          %610 = sbr.rel (%p608) target = $region64
        $region63: #{pooler_end_logits.1} parent=43 // pred_region
          _
        $region64: #{pooler_end_logits.1} parent=43 // pred_fallthru
          _
      $region44: #{pooler_end_logits.1} parent=5 // pred_fallthru
        _
      %p611 = scmp.le.s32.totalorder 2, %s19
      // Predicated region
      $region65: #{pooler_end_logits.1} parent=5 // pred_check
        %p612 = pneg %p611
      $region66: #{pooler_end_logits.1} parent=5 // pred_check_branch
        %614 = sbr.rel (%p612) target = $region68
      $region67: #{pooler_end_logits.1} parent=5 // pred_region
        %s615 = ssub.s32 %s19, 2
        // Predicated region
        $region69: #{pooler_end_logits.1} parent=67 // pred_check
          %p616 = pneg %p184
        $region70: #{pooler_end_logits.1} parent=67 // pred_check_branch
          %618 = sbr.rel (%p616) target = $region72
        $region71: #{pooler_end_logits.1} parent=67 // pred_region
          %p619 = scmp.lt.s32.totalorder %s25, 1
          %s620 = scalar_select %p619, %s25, 1
          %s621 = smul.addr %s620, 8
          %s622 = scalar_lea.vmem %s6, %s621
        $region72: #{pooler_end_logits.1} parent=67 // pred_fallthru
          _
      $region68: #{pooler_end_logits.1} parent=5 // pred_fallthru
        _
    $region6: #{pooler_end_logits.1} parent=1 // loop_footer
      %s23 = sadd.s32 1, %s19
    $region7: #{pooler_end_logits.1} parent=1 // loop_footer_branch
      %18 = sbr.rel target = $region3
    $region8: #{pooler_end_logits.1} parent=1 // loop_exit
      _
    %623 = vsyncpa [#allocation3], 1
    %s624 = scalar_lea.sflag [#allocation3], 1
    %625 = vsyncpa %s624, 1
    %626 = vsyncpa [#allocation5], 1
    %s627 = scalar_lea.sflag [#allocation5], 1
    %628 = vsyncpa %s627, 1
    %629 = vsyncpa [#allocation8], 1

</llo_original>
